<compile_context>
chip_gen: v7x
topology: tpu7x:2x2x1
jax: 0.10.0
libtpu: 0.0.40
codegen_flags: <defaults>
</compile_context>

<pallas_src>
import math
from functools import partial

import jax
import jax.numpy as jnp
from jax import lax
from jax.experimental import pallas as pl
from jax.experimental.pallas import tpu as pltpu


def _qkv_attn_kernel(q_ref, kt_ref, v_ref, out_ref, m_sc, l_sc, acc_sc, *,
                     ch, out_is_f32):
    """One grid step (head-block b, query tile qi, key tile ki).

    q_ref:   [BB, C, TQ]   query tile (input dtype)
    kt_ref:  [BB, TK, C]   key tile, pre-transposed (input dtype)
    v_ref:   [BB, C, TK]   value tile (input dtype)
    out_ref: [BB, C, TQ]
    m_sc/l_sc: [BB, 1, TQ] f32 running max / row-sum (online softmax)
    acc_sc:    [BB, C, TQ] f32 unnormalized output accumulator
    """
    ki = pl.program_id(2)

    @pl.when(ki == 0)
    def _init():
        m_sc[...] = jnp.full(m_sc.shape, -jnp.inf, jnp.float32)
        l_sc[...] = jnp.zeros(l_sc.shape, jnp.float32)
        acc_sc[...] = jnp.zeros(acc_sc.shape, jnp.float32)

    # Combined scale: reference applies ch**-0.25 to both q and k, i.e.
    # ch**-0.5 overall.  Fold it into q only (smallest operand).
    scale = jnp.asarray(ch ** (-0.5), dtype=q_ref.dtype)
    q = q_ref[...] * scale          # [BB, C, TQ]
    kt = kt_ref[...]                # [BB, TK, C]
    v = v_ref[...]                  # [BB, C, TK]

    # s[b, s_key, t] = sum_c kt[b, s_key, c] * q[b, c, t]
    # Keys on sublanes, queries on lanes.  LHS contracts its last dim, RHS its
    # second-to-last -> both operands MXU-native, no relayout, f32 accumulate.
    s = lax.dot_general(
        kt, q,
        dimension_numbers=(((2,), (1,)), ((0,), (0,))),
        preferred_element_type=jnp.float32,
    )                                # [BB, TK, TQ] f32

    # Online softmax over the key (sublane) axis; statistics are [BB, 1, TQ]
    # so they broadcast over both the score tile and the accumulator without
    # any swapaxes.
    m_prev = m_sc[...]
    m_new = jnp.maximum(m_prev, jnp.max(s, axis=-2, keepdims=True))   # [BB,1,TQ]
    alpha = jnp.exp(m_prev - m_new)                                   # [BB,1,TQ]
    p = jnp.exp(s - m_new)                                            # [BB,TK,TQ] f32
    l_sc[...] = alpha * l_sc[...] + jnp.sum(p, axis=-2, keepdims=True)

    # a[b, c, t] += sum_s v[b, c, s] * p[b, s, t]
    # p is already in the MXU-native stationary layout (contraction on its
    # second-to-last dim); cast once to the value dtype for bf16-rate MXU.
    pv = lax.dot_general(
        v, p.astype(v.dtype),
        dimension_numbers=(((2,), (1,)), ((0,), (0,))),
        preferred_element_type=jnp.float32,
    )                                # [BB, C, TQ] f32
    acc_sc[...] = alpha * acc_sc[...] + pv
    m_sc[...] = m_new

    @pl.when(ki == pl.num_programs(2) - 1)
    def _finalize():
        # Exact reciprocal for f32 parity; EUP approx error is far below bf16
        # precision, so use the (free) approximate path otherwise.
        inv_l = pl.reciprocal(l_sc[...], approx=not out_is_f32)       # [BB,1,TQ]
        out_ref[...] = (acc_sc[...] * inv_l).astype(out_ref.dtype)


def _vmem_capacity_bytes():
    """Generation-aware VMEM capacity (falls back to the smallest, v7x)."""
    try:
        info = pltpu.get_tpu_info()
        cap = getattr(info, "vmem_capacity_bytes", None)
        if cap:
            return int(cap)
    except Exception:
        pass
    return 64 * 1024 * 1024


def _largest_divisor_leq(n, cap):
    cap = max(1, min(n, int(cap)))
    for d in range(cap, 0, -1):
        if n % d == 0:
            return d
    return 1


def _pick_tiles(B, ch, T, itemsize, budget):
    """Choose (heads_per_block, query_tile, key_tile, est_bytes)."""
    # Lane-dense query tile.  TQ=256 preferred over 512 (keeps BB >= 2 and the
    # head axis shardable on v7x) while staying a lane multiple of 128.
    tq = T
    for cand in (256, 128):
        if T % cand == 0:
            tq = cand
            break
    # Key tile (sublane axis of the score matrix / contraction of matmul 2).
    tk = T
    for cand in (512, 256, 128):
        if T % cand == 0:
            tk = cand
            break

    def per_head_bytes():
        dbl = 2                                   # double-buffered pipelined blocks
        q_b   = dbl * ch * tq * itemsize
        kt_b  = dbl * tk * ch * itemsize
        v_b   = dbl * ch * tk * itemsize
        o_b   = dbl * ch * tq * itemsize
        acc_b = ch * tq * 4                       # f32 accumulator scratch
        ml_b  = 2 * 8 * tq * 4                    # m/l scratch (sublane-padded)
        s_b   = tk * tq * 4                       # f32 scores
        p_b   = tk * tq * 4                       # f32 exp (coexists with s)
        pc_b  = tk * tq * itemsize                # cast copy fed to the MXU
        return q_b + kt_b + v_b + o_b + acc_b + ml_b + s_b + p_b + pc_b

    phb = per_head_bytes()
    max_bb = max(1, budget // phb)
    bb = _largest_divisor_leq(B, min(max_bb, 16))
    # Keep the head-block grid axis >= 2 when possible so it stays shardable
    # across the 2 TensorCores of a v7x megacore.
    if B > 1 and B // bb == 1:
        bb = _largest_divisor_leq(B, max(1, B // 2))
    return bb, tq, tk, bb * phb


def qkv_attention_legacy(qkv, n_heads):
    """
    :param qkv: [N, H*3*C, T] array of Qs, Ks, Vs.
    :return:    [N, H*C, T] array after attention.
    """
    bs, width, length = qkv.shape
    assert width % (3 * n_heads) == 0
    ch = width // (3 * n_heads)
    B = bs * n_heads
    itemsize = qkv.dtype.itemsize

    # Plain-JAX glue (once, in HBM): split the packed layout and pre-transpose
    # K to [B, T, C] so both in-kernel matmuls use MXU-native operand layouts.
    x = qkv.reshape(bs, n_heads, 3, ch, length)
    q = x[:, :, 0].reshape(B, ch, length)
    kt = jnp.swapaxes(x[:, :, 1], -1, -2).reshape(B, length, ch)
    v = x[:, :, 2].reshape(B, ch, length)

    cap = _vmem_capacity_bytes()
    budget = int(0.55 * cap)                      # tile-sizing working-set cap
    bb, tq, tk, est = _pick_tiles(B, ch, length, itemsize, budget)
    grid = (B // bb, length // tq, length // tk)

    # Megacore: shard the head-block axis (disjoint K/V per core); key axis is
    # the reduction and stays last / "arbitrary".
    if grid[0] > 1:
        dims = ("parallel", "arbitrary", "arbitrary")
    else:
        dims = ("arbitrary", "parallel", "arbitrary")

    vmem_limit = int(min(0.85 * cap, max(2 * est, 32 * 1024 * 1024)))

    cost = pl.CostEstimate(
        flops=int(4 * B * ch * length * length),
        transcendentals=int(B * length * length),
        bytes_accessed=int(itemsize * (2 * B * ch * length
                                       + 2 * (length // tq) * B * ch * length)),
    )

    out = pl.pallas_call(
        partial(_qkv_attn_kernel, ch=ch,
                out_is_f32=(qkv.dtype == jnp.float32)),
        out_shape=jax.ShapeDtypeStruct((B, ch, length), qkv.dtype),
        grid=grid,
        in_specs=[
            pl.BlockSpec((bb, ch, tq), lambda b, qi, ki: (b, 0, qi)),   # q tile
            pl.BlockSpec((bb, tk, ch), lambda b, qi, ki: (b, ki, 0)),   # k^T tile
            pl.BlockSpec((bb, ch, tk), lambda b, qi, ki: (b, 0, ki)),   # v tile
        ],
        out_specs=pl.BlockSpec((bb, ch, tq), lambda b, qi, ki: (b, 0, qi)),
        scratch_shapes=[
            pltpu.VMEM((bb, 1, tq), jnp.float32),    # running max m
            pltpu.VMEM((bb, 1, tq), jnp.float32),    # running sum l
            pltpu.VMEM((bb, ch, tq), jnp.float32),   # unnormalized acc
        ],
        compiler_params=pltpu.CompilerParams(
            dimension_semantics=dims,
            vmem_limit_bytes=vmem_limit,
        ),
        cost_estimate=cost,
    )(q, kt, v)

    return out.reshape(bs, n_heads * ch, length)


def _reference(qkv, n_heads):
    """Pure-JAX reference mirroring the PyTorch forward."""
    bs, width, length = qkv.shape
    ch = width // (3 * n_heads)
    x = qkv.reshape(bs * n_heads, 3 * ch, length)
    q, k, v = x[:, :ch], x[:, ch:2 * ch], x[:, 2 * ch:]
    scale = 1.0 / math.sqrt(math.sqrt(ch))
    w = jnp.einsum('bct,bcs->bts', q * scale, k * scale)
    w = jax.nn.softmax(w.astype(jnp.float32), axis=-1).astype(w.dtype)
    a = jnp.einsum('bts,bcs->bct', w, v)
    return a.reshape(bs, -1, length)


if __name__ == "__main__":
    # Primary small f32 example consistent with the module:
    # N=2 batch, H=2 heads, C=8 channels/head, T=16 sequence positions.
    N, H, C, T = 2, 2, 8, 16
    key = jax.random.PRNGKey(0)
    qkv = jax.random.normal(key, (N, H * 3 * C, T), dtype=jnp.float32)

    out = jax.block_until_ready(qkv_attention_legacy(qkv, n_heads=H))
    ref = _reference(qkv, n_heads=H)
    assert out.shape == (N, H * C, T), out.shape
    assert jnp.allclose(out, ref, atol=1e-5, rtol=1e-5), "f32 mismatch vs reference"

    # Secondary bf16 example exercising the tiled path (multiple query AND key
    # tiles per head block, online softmax) and the mixed-precision MXU path.
    N2, H2, C2, T2 = 2, 2, 32, 384
    key2 = jax.random.PRNGKey(0)
    qkv2 = jax.random.normal(key2, (N2, H2 * 3 * C2, T2), dtype=jnp.bfloat16)

    out2 = jax.block_until_ready(qkv_attention_legacy(qkv2, n_heads=H2))
    ref2 = _reference(qkv2.astype(jnp.float32), n_heads=H2)
    assert out2.shape == (N2, H2 * C2, T2), out2.shape
    assert jnp.allclose(out2.astype(jnp.float32), ref2, atol=5e-2, rtol=5e-2), \
        "bf16 mismatch vs f32 reference"

    print("KERNEL_OK")
</pallas_src>

<mosaic_0001>
module attributes {stable_mosaic.version = 11 : i64} {
  func.func @_qkv_attn_kernel(%arg0: i32, %arg1: i32, %arg2: i32, %arg3: memref<2x8x16xf32, #tpu.memory_space<vmem>>, %arg4: memref<2x16x8xf32, #tpu.memory_space<vmem>>, %arg5: memref<2x8x16xf32, #tpu.memory_space<vmem>>, %arg6: memref<2x8x16xf32, #tpu.memory_space<vmem>>, %arg7: memref<2x1x16xf32, #tpu.memory_space<vmem>>, %arg8: memref<2x1x16xf32, #tpu.memory_space<vmem>>, %arg9: memref<2x8x16xf32, #tpu.memory_space<vmem>>) attributes {dimension_semantics = [#tpu.dimension_semantics<parallel>, #tpu.dimension_semantics<arbitrary>, #tpu.dimension_semantics<arbitrary>], iteration_bounds = array<i64: 2, 1, 1>, scalar_prefetch = 0 : i64, scratch_operands = 3 : i64, tpu.core_type = #tpu.core_type<tc>, window_params = [{transform_indices = @transform_0, window_bounds = array<i64: 2, 8, 16>}, {transform_indices = @transform_1, window_bounds = array<i64: 2, 16, 8>}, {transform_indices = @transform_2, window_bounds = array<i64: 2, 8, 16>}, {transform_indices = @transform_3, window_bounds = array<i64: 2, 8, 16>}]} {
    %c0_i32 = arith.constant 0 : i32
    %0 = arith.cmpi eq, %arg2, %c0_i32 : i32
    %1 = arith.extui %0 : i1 to i32
    %c0_i32_0 = arith.constant 0 : i32
    %2 = arith.cmpi ne, %1, %c0_i32_0 : i32
    scf.if %2 {
      %cst_33 = arith.constant 0xFF800000 : f32
      %34 = vector.broadcast %cst_33 : f32 to vector<2x1x16xf32>
      %c0_34 = arith.constant 0 : index
      %c0_35 = arith.constant 0 : index
      %c0_36 = arith.constant 0 : index
      %35 = vector.load %arg7[%c0_34, %c0_35, %c0_36] : memref<2x1x16xf32, #tpu.memory_space<vmem>>, vector<2x1x16xf32>
      tpu.vector_store %arg7[%c0_34, %c0_35, %c0_36], %34 {strides = array<i32>} : memref<2x1x16xf32, #tpu.memory_space<vmem>>, vector<2x1x16xf32>,
      %cst_37 = arith.constant 0.000000e+00 : f32
      %36 = vector.broadcast %cst_37 : f32 to vector<2x1x16xf32>
      %c0_38 = arith.constant 0 : index
      %c0_39 = arith.constant 0 : index
      %c0_40 = arith.constant 0 : index
      %37 = vector.load %arg8[%c0_38, %c0_39, %c0_40] : memref<2x1x16xf32, #tpu.memory_space<vmem>>, vector<2x1x16xf32>
      tpu.vector_store %arg8[%c0_38, %c0_39, %c0_40], %36 {strides = array<i32>} : memref<2x1x16xf32, #tpu.memory_space<vmem>>, vector<2x1x16xf32>,
      %cst_41 = arith.constant 0.000000e+00 : f32
      %38 = vector.broadcast %cst_41 : f32 to vector<2x8x16xf32>
      %c0_42 = arith.constant 0 : index
      %c0_43 = arith.constant 0 : index
      %c0_44 = arith.constant 0 : index
      %39 = vector.load %arg9[%c0_42, %c0_43, %c0_44] : memref<2x8x16xf32, #tpu.memory_space<vmem>>, vector<2x8x16xf32>
      tpu.vector_store %arg9[%c0_42, %c0_43, %c0_44], %38 {strides = array<i32>} : memref<2x8x16xf32, #tpu.memory_space<vmem>>, vector<2x8x16xf32>,
    } else {
    }
    %c0 = arith.constant 0 : index
    %c0_1 = arith.constant 0 : index
    %c0_2 = arith.constant 0 : index
    %3 = vector.load %arg3[%c0, %c0_1, %c0_2] : memref<2x8x16xf32, #tpu.memory_space<vmem>>, vector<2x8x16xf32>
    %cst = arith.constant 0.353553385 : f32
    %4 = vector.broadcast %cst : f32 to vector<2x8x16xf32>
    %5 = arith.mulf %3, %4 : vector<2x8x16xf32>
    %c0_3 = arith.constant 0 : index
    %c0_4 = arith.constant 0 : index
    %c0_5 = arith.constant 0 : index
    %6 = vector.load %arg4[%c0_3, %c0_4, %c0_5] : memref<2x16x8xf32, #tpu.memory_space<vmem>>, vector<2x16x8xf32>
    %c0_6 = arith.constant 0 : index
    %c0_7 = arith.constant 0 : index
    %c0_8 = arith.constant 0 : index
    %7 = vector.load %arg5[%c0_6, %c0_7, %c0_8] : memref<2x8x16xf32, #tpu.memory_space<vmem>>, vector<2x8x16xf32>
    %cst_9 = arith.constant dense<0.000000e+00> : vector<2x16x16xf32>
    %8 = tpu.matmul %6, %5, %cst_9 {dimension_numbers = #tpu.dot_dimension_numbers<[2], [1], [1], [2], [0, 0, 0, 1, 1, 2], [0], [0]>} : vector<2x16x8xf32>, vector<2x8x16xf32>, vector<2x16x16xf32> -> vector<2x16x16xf32>
    %c0_10 = arith.constant 0 : index
    %c0_11 = arith.constant 0 : index
    %c0_12 = arith.constant 0 : index
    %9 = vector.load %arg7[%c0_10, %c0_11, %c0_12] : memref<2x1x16xf32, #tpu.memory_space<vmem>>, vector<2x1x16xf32>
    %cst_13 = arith.constant dense<0xFF800000> : vector<2x16xf32>
    %10 = vector.multi_reduction <maximumf>, %8, %cst_13 [1] : vector<2x16x16xf32> to vector<2x16xf32>
    %11 = vector.shape_cast %10 : vector<2x16xf32> to vector<2x1x16xf32>
    %12 = arith.maximumf %9, %11 : vector<2x1x16xf32>
    %13 = arith.subf %9, %12 : vector<2x1x16xf32>
    %14 = math.exp %13 : vector<2x1x16xf32>
    %15 = vector.broadcast %12 : vector<2x1x16xf32> to vector<2x16x16xf32>
    %16 = arith.subf %8, %15 : vector<2x16x16xf32>
    %17 = math.exp %16 : vector<2x16x16xf32>
    %c0_14 = arith.constant 0 : index
    %c0_15 = arith.constant 0 : index
    %c0_16 = arith.constant 0 : index
    %18 = vector.load %arg8[%c0_14, %c0_15, %c0_16] : memref<2x1x16xf32, #tpu.memory_space<vmem>>, vector<2x1x16xf32>
    %19 = arith.mulf %14, %18 : vector<2x1x16xf32>
    %cst_17 = arith.constant dense<0.000000e+00> : vector<2x16xf32>
    %20 = vector.multi_reduction <add>, %17, %cst_17 [1] : vector<2x16x16xf32> to vector<2x16xf32>
    %21 = vector.shape_cast %20 : vector<2x16xf32> to vector<2x1x16xf32>
    %22 = arith.addf %19, %21 : vector<2x1x16xf32>
    %c0_18 = arith.constant 0 : index
    %c0_19 = arith.constant 0 : index
    %c0_20 = arith.constant 0 : index
    %23 = vector.load %arg8[%c0_18, %c0_19, %c0_20] : memref<2x1x16xf32, #tpu.memory_space<vmem>>, vector<2x1x16xf32>
    tpu.vector_store %arg8[%c0_18, %c0_19, %c0_20], %22 {strides = array<i32>} : memref<2x1x16xf32, #tpu.memory_space<vmem>>, vector<2x1x16xf32>,
    %cst_21 = arith.constant dense<0.000000e+00> : vector<2x8x16xf32>
    %24 = tpu.matmul %7, %17, %cst_21 {dimension_numbers = #tpu.dot_dimension_numbers<[2], [1], [1], [2], [0, 0, 0, 1, 1, 2], [0], [0]>} : vector<2x8x16xf32>, vector<2x16x16xf32>, vector<2x8x16xf32> -> vector<2x8x16xf32>
    %c0_22 = arith.constant 0 : index
    %c0_23 = arith.constant 0 : index
    %c0_24 = arith.constant 0 : index
    %25 = vector.load %arg9[%c0_22, %c0_23, %c0_24] : memref<2x8x16xf32, #tpu.memory_space<vmem>>, vector<2x8x16xf32>
    %26 = vector.broadcast %14 : vector<2x1x16xf32> to vector<2x8x16xf32>
    %27 = arith.mulf %26, %25 : vector<2x8x16xf32>
    %28 = arith.addf %27, %24 : vector<2x8x16xf32>
    %c0_25 = arith.constant 0 : index
    %c0_26 = arith.constant 0 : index
    %c0_27 = arith.constant 0 : index
    %29 = vector.load %arg9[%c0_25, %c0_26, %c0_27] : memref<2x8x16xf32, #tpu.memory_space<vmem>>, vector<2x8x16xf32>
    tpu.vector_store %arg9[%c0_25, %c0_26, %c0_27], %28 {strides = array<i32>} : memref<2x8x16xf32, #tpu.memory_space<vmem>>, vector<2x8x16xf32>,
    %c0_28 = arith.constant 0 : index
    %c0_29 = arith.constant 0 : index
    %c0_30 = arith.constant 0 : index
    %30 = vector.load %arg7[%c0_28, %c0_29, %c0_30] : memref<2x1x16xf32, #tpu.memory_space<vmem>>, vector<2x1x16xf32>
    tpu.vector_store %arg7[%c0_28, %c0_29, %c0_30], %12 {strides = array<i32>} : memref<2x1x16xf32, #tpu.memory_space<vmem>>, vector<2x1x16xf32>,
    %c0_i32_31 = arith.constant 0 : i32
    %31 = arith.cmpi eq, %arg2, %c0_i32_31 : i32
    %32 = arith.extui %31 : i1 to i32
    %c0_i32_32 = arith.constant 0 : i32
    %33 = arith.cmpi ne, %32, %c0_i32_32 : i32
    scf.if %33 {
      %c0_33 = arith.constant 0 : index
      %c0_34 = arith.constant 0 : index
      %c0_35 = arith.constant 0 : index
      %34 = vector.load %arg8[%c0_33, %c0_34, %c0_35] : memref<2x1x16xf32, #tpu.memory_space<vmem>>, vector<2x1x16xf32>
      %35 = tpu.reciprocal %34 : vector<2x1x16xf32> -> vector<2x1x16xf32>
      %c0_36 = arith.constant 0 : index
      %c0_37 = arith.constant 0 : index
      %c0_38 = arith.constant 0 : index
      %36 = vector.load %arg9[%c0_36, %c0_37, %c0_38] : memref<2x8x16xf32, #tpu.memory_space<vmem>>, vector<2x8x16xf32>
      %37 = vector.broadcast %35 : vector<2x1x16xf32> to vector<2x8x16xf32>
      %38 = arith.mulf %36, %37 : vector<2x8x16xf32>
      %c0_39 = arith.constant 0 : index
      %c0_40 = arith.constant 0 : index
      %c0_41 = arith.constant 0 : index
      %39 = vector.load %arg6[%c0_39, %c0_40, %c0_41] : memref<2x8x16xf32, #tpu.memory_space<vmem>>, vector<2x8x16xf32>
      tpu.vector_store %arg6[%c0_39, %c0_40, %c0_41], %38 {strides = array<i32>} : memref<2x8x16xf32, #tpu.memory_space<vmem>>, vector<2x8x16xf32>,
    } else {
    }
    return
  }
  func.func @transform_0(%arg0: i32, %arg1: i32, %arg2: i32) -> (i32, i32, i32) {
    %c0_i32 = arith.constant 0 : i32
    %c0_i32_0 = arith.constant 0 : i32
    return %arg0, %c0_i32, %arg1 : i32, i32, i32
  }
  func.func @transform_1(%arg0: i32, %arg1: i32, %arg2: i32) -> (i32, i32, i32) {
    %c0_i32 = arith.constant 0 : i32
    %c0_i32_0 = arith.constant 0 : i32
    return %arg0, %arg2, %c0_i32 : i32, i32, i32
  }
  func.func @transform_2(%arg0: i32, %arg1: i32, %arg2: i32) -> (i32, i32, i32) {
    %c0_i32 = arith.constant 0 : i32
    %c0_i32_0 = arith.constant 0 : i32
    return %arg0, %c0_i32, %arg2 : i32, i32, i32
  }
  func.func @transform_3(%arg0: i32, %arg1: i32, %arg2: i32) -> (i32, i32, i32) {
    %c0_i32 = arith.constant 0 : i32
    %c0_i32_0 = arith.constant 0 : i32
    return %arg0, %c0_i32, %arg1 : i32, i32, i32
  }
}

</mosaic_0001>

<llo_original>
// kernel: tpu_custom_call.1
$region0: #{tpu_custom_call.1}
  #allocation0 [shape = 'u32[]', space=smem, size = 0x4, offset = 0x4, fixed_abs, tag = 'smem constant byte address 0x4 - core index']
  #allocation1 [shape = 'u32[144,128]{1,0:T(1,128)}', space=vmem, size = 0x12000, scoped, tag = 'internal scratch']
  #allocation2 [shape = 'f32[2,1,16]{2,1,0:T(1,128)}', space=vmem, size = 0x400, scoped, tag = 'scratch operand']
  #allocation3 [shape = 'f32[2,1,16]{2,1,0:T(1,128)}', space=vmem, size = 0x400, scoped, tag = 'scratch operand']
  #allocation4 [shape = 'f32[2,8,16]{2,1,0:T(8,128)}', space=vmem, size = 0x2000, scoped, tag = 'scratch operand']
  %s0 = inlined_call_operand.vmem [shape: f32[4,8,16], index: 0, kind: input, shape index: {}]
  %s1 = inlined_call_operand.vmem [shape: f32[4,16,8], index: 1, kind: input, shape index: {}]
  %s2 = inlined_call_operand.vmem [shape: f32[4,8,16], index: 2, kind: input, shape index: {}]
  %s3 = inlined_call_operand.hbm [shape: f32[4,8,16], index: 3, kind: output, shape index: {}]
  %s4 = sld [smem:[#allocation0]]
  $region53: #{tpu_custom_call.1} parent=0
    _
  %s6 = ssub.s32 1, %s4
  %s7 = scalar_select 0, %s6, %s4
  $region1: #{tpu_custom_call.1} parent=0
    #allocation5 [shape = 'u8[16384]{0}', space=vmem, size = 0x4000, scoped, tag = 'output window, operand 0']
    #allocation6 [shape = 's32[2]{0}', space=sflag, size = 0x8, scoped, tag = 'scoped memory for tpu_custom_call.1']
    %8 = vsyncpa [#allocation6], 0
    %s9 = scalar_lea.sflag [#allocation6], 1
    %10 = vsyncpa %s9, 0
    loop: start=0, step=1, limit=4
    $region2: #{tpu_custom_call.1} parent=1 // loop_pre_header
      _
    $region3: #{tpu_custom_call.1} parent=1 // loop_header
      %s12 = sphi 0, %s16
      %p13 = scmp.ge.s32.totalorder %s12, 4
      %s19 = sphi 0, %s38
      %s20 = sphi 0, %s34
      %s21 = sphi 0, %s30
      %s22 = sphi 0, %s19
      %s23 = sphi 0, %s20
      %s24 = sphi 0, %s21
      %s25 = sphi 0, %s22
      %s26 = sphi 0, %s23
      %s27 = sphi 0, %s24
      %s43 = sphi 0, %s45
      %s46 = sphi 0, %s43
      %s47 = sphi 0, %s46
      %s63 = sphi 0, %s47
      %s71 = sphi 0, %s73
      %s74 = sphi 0, %s71
      %s75 = sphi 0, %s74
      %s91 = sphi 0, %s75
      %s99 = sphi 0, %s101
      %s102 = sphi 0, %s99
      %s103 = sphi 0, %s102
      %s119 = sphi 0, %s103
      %s127 = sphi 0, %s129
      %s130 = sphi 0, %s127
      %s131 = sphi 0, %s130
      %s147 = sphi 0, %s131
    $region4: #{tpu_custom_call.1} parent=1 // loop_header_branch
      %15 = sbr.rel (%p13) target = $region8
    $region5: #{tpu_custom_call.1} parent=1 // loop_body
      %s17 = ssub.s32 %s12, 1
      %s18 = ssub.s32 %s12, 2
      %s28 = sadd.s32 1, %s21
      %p29 = scmp.ge.s32.totalorder %s28, 1
      %s30 = scalar_select %p29, 0, %s28
      %s31 = sadd.s32 1, %s20
      %s32 = scalar_select %p29, %s31, %s20
      %p33 = scmp.ge.s32.totalorder %s32, 1
      %s34 = scalar_select %p33, 0, %s32
      %s35 = sadd.s32 1, %s19
      %s36 = scalar_select %p33, %s35, %s19
      %p37 = scmp.ge.s32.totalorder %s36, 2
      %s38 = scalar_select %p37, 0, %s36
      %s39 = ssub.s32 %s19, %s38
      %s40 = ssub.s32 %s20, %s34
      %s41 = sor.u32 %s39, %s40
      %p42 = scmp.eq.s32.totalorder %s41, 0
      %s44 = sadd.s32 %s43, 1
      %s45 = scalar_select %p42, %s43, %s44
      %p48 = pneg %p42
      %p49 = scmp.eq.s32.totalorder %s12, 1
      %p50 = por %p48, %p49
      %p51 = scmp.ne.s32.totalorder %s43, %s46
      %p52 = scmp.eq.s32.totalorder %s12, 0
      %p53 = por %p51, %p52
      %p54 = scmp.ne.s32.totalorder %s43, %s46
      %p55 = scmp.eq.s32.totalorder %s17, 1
      %p56 = por %p54, %p55
      %p57 = scmp.ne.s32.totalorder %s46, %s47
      %p58 = scmp.eq.s32.totalorder %s17, 0
      %p59 = por %p57, %p58
      %p60 = scmp.ne.s32.totalorder %s46, %s47
      %p61 = scmp.eq.s32.totalorder %s18, 1
      %p62 = por %p60, %p61
      %p64 = scmp.ne.s32.totalorder %s47, %s63
      %p65 = scmp.eq.s32.totalorder %s18, 0
      %p66 = por %p64, %p65
      %s67 = ssub.s32 %s19, %s38
      %s68 = ssub.s32 %s21, %s30
      %s69 = sor.u32 %s67, %s68
      %p70 = scmp.eq.s32.totalorder %s69, 0
      %s72 = sadd.s32 %s71, 1
      %s73 = scalar_select %p70, %s71, %s72
      %p76 = pneg %p70
      %p77 = scmp.eq.s32.totalorder %s12, 1
      %p78 = por %p76, %p77
      %p79 = scmp.ne.s32.totalorder %s71, %s74
      %p80 = scmp.eq.s32.totalorder %s12, 0
      %p81 = por %p79, %p80
      %p82 = scmp.ne.s32.totalorder %s71, %s74
      %p83 = scmp.eq.s32.totalorder %s17, 1
      %p84 = por %p82, %p83
      %p85 = scmp.ne.s32.totalorder %s74, %s75
      %p86 = scmp.eq.s32.totalorder %s17, 0
      %p87 = por %p85, %p86
      %p88 = scmp.ne.s32.totalorder %s74, %s75
      %p89 = scmp.eq.s32.totalorder %s18, 1
      %p90 = por %p88, %p89
      %p92 = scmp.ne.s32.totalorder %s75, %s91
      %p93 = scmp.eq.s32.totalorder %s18, 0
      %p94 = por %p92, %p93
      %s95 = ssub.s32 %s19, %s38
      %s96 = ssub.s32 %s21, %s30
      %s97 = sor.u32 %s95, %s96
      %p98 = scmp.eq.s32.totalorder %s97, 0
      %s100 = sadd.s32 %s99, 1
      %s101 = scalar_select %p98, %s99, %s100
      %p104 = pneg %p98
      %p105 = scmp.eq.s32.totalorder %s12, 1
      %p106 = por %p104, %p105
      %p107 = scmp.ne.s32.totalorder %s99, %s102
      %p108 = scmp.eq.s32.totalorder %s12, 0
      %p109 = por %p107, %p108
      %p110 = scmp.ne.s32.totalorder %s99, %s102
      %p111 = scmp.eq.s32.totalorder %s17, 1
      %p112 = por %p110, %p111
      %p113 = scmp.ne.s32.totalorder %s102, %s103
      %p114 = scmp.eq.s32.totalorder %s17, 0
      %p115 = por %p113, %p114
      %p116 = scmp.ne.s32.totalorder %s102, %s103
      %p117 = scmp.eq.s32.totalorder %s18, 1
      %p118 = por %p116, %p117
      %p120 = scmp.ne.s32.totalorder %s103, %s119
      %p121 = scmp.eq.s32.totalorder %s18, 0
      %p122 = por %p120, %p121
      %s123 = ssub.s32 %s19, %s38
      %s124 = ssub.s32 %s20, %s34
      %s125 = sor.u32 %s123, %s124
      %p126 = scmp.eq.s32.totalorder %s125, 0
      %s128 = sadd.s32 %s127, 1
      %s129 = scalar_select %p126, %s127, %s128
      %p132 = pneg %p126
      %p133 = scmp.eq.s32.totalorder %s12, 1
      %p134 = por %p132, %p133
      %p135 = scmp.ne.s32.totalorder %s127, %s130
      %p136 = scmp.eq.s32.totalorder %s12, 0
      %p137 = por %p135, %p136
      %p138 = scmp.ne.s32.totalorder %s127, %s130
      %p139 = scmp.eq.s32.totalorder %s17, 1
      %p140 = por %p138, %p139
      %p141 = scmp.ne.s32.totalorder %s130, %s131
      %p142 = scmp.eq.s32.totalorder %s17, 0
      %p143 = por %p141, %p142
      %p144 = scmp.ne.s32.totalorder %s130, %s131
      %p145 = scmp.eq.s32.totalorder %s18, 1
      %p146 = por %p144, %p145
      %p148 = scmp.ne.s32.totalorder %s131, %s147
      %p149 = scmp.eq.s32.totalorder %s18, 0
      %p150 = por %p148, %p149
      %p151 = scmp.le.s32.totalorder 1, %s12
      %p152 = scmp.lt.s32.totalorder %s12, 3
      %p153 = pnand %p151, %p152
      %p154 = pneg %p153
      // Predicated region
      $region9: #{tpu_custom_call.1} parent=5 // pred_check
        _
      $region10: #{tpu_custom_call.1} parent=5 // pred_check_branch
        %156 = sbr.rel (%p153) target = $region12
      $region11: #{tpu_custom_call.1} parent=5 // pred_region
        %s157 = ssub.s32 %s12, 1
      $region12: #{tpu_custom_call.1} parent=5 // pred_fallthru
        _
      %p158 = scmp.lt.s32.totalorder %s12, 2
      // Predicated region
      $region13: #{tpu_custom_call.1} parent=5 // pred_check
        %p159 = pneg %p158
      $region14: #{tpu_custom_call.1} parent=5 // pred_check_branch
        %161 = sbr.rel (%p159) target = $region16
      $region15: #{tpu_custom_call.1} parent=5 // pred_region
        // Predicated region
        $region17: #{tpu_custom_call.1} parent=15 // pred_check
          %p162 = pneg %p53
        $region18: #{tpu_custom_call.1} parent=15 // pred_check_branch
          %164 = sbr.rel (%p162) target = $region20
        $region19: #{tpu_custom_call.1} parent=15 // pred_region
          %s165 = smul.u32 2, %s19
          %p166 = scmp.lt.s32.totalorder %s165, 3
          %s167 = scalar_select %p166, %s165, 3
          %p168 = scmp.lt.s32.totalorder %s20, 0
          %s169 = scalar_select %p168, %s20, 0
          %s170 = sadd.s32 %s169, %s167
          %s171 = smul.addr %s170, 8
          %s172 = scalar_lea.vmem %s0, %s171
          %s173 = smul.u32 2, %s19
        $region20: #{tpu_custom_call.1} parent=15 // pred_fallthru
          _
        // Predicated region
        $region21: #{tpu_custom_call.1} parent=15 // pred_check
          %p174 = pneg %p81
        $region22: #{tpu_custom_call.1} parent=15 // pred_check_branch
          %176 = sbr.rel (%p174) target = $region24
        $region23: #{tpu_custom_call.1} parent=15 // pred_region
          %s177 = smul.u32 2, %s19
          %s178 = smul.u32 2, %s21
          %p179 = scmp.lt.s32.totalorder %s177, 3
          %s180 = scalar_select %p179, %s177, 3
          %p181 = scmp.lt.s32.totalorder %s178, 1
          %s182 = scalar_select %p181, %s178, 1
          %s183 = smul.addr %s180, 2
          %s184 = sadd.s32 %s182, %s183
          %s185 = smul.addr %s184, 8
          %s186 = scalar_lea.vmem %s1, %s185
          %s187 = smul.u32 2, %s19
          %s188 = smul.u32 2, %s21
        $region24: #{tpu_custom_call.1} parent=15 // pred_fallthru
          _
        // Predicated region
        $region25: #{tpu_custom_call.1} parent=15 // pred_check
          %p189 = pneg %p109
        $region26: #{tpu_custom_call.1} parent=15 // pred_check_branch
          %191 = sbr.rel (%p189) target = $region28
        $region27: #{tpu_custom_call.1} parent=15 // pred_region
          %s192 = smul.u32 2, %s19
          %p193 = scmp.lt.s32.totalorder %s192, 3
          %s194 = scalar_select %p193, %s192, 3
          %p195 = scmp.lt.s32.totalorder %s21, 0
          %s196 = scalar_select %p195, %s21, 0
          %s197 = sadd.s32 %s196, %s194
          %s198 = smul.addr %s197, 8
          %s199 = scalar_lea.vmem %s2, %s198
          %s200 = smul.u32 2, %s19
        $region28: #{tpu_custom_call.1} parent=15 // pred_fallthru
          _
      $region16: #{tpu_custom_call.1} parent=5 // pred_fallthru
        _
      %p201 = scmp.le.s32.totalorder 1, %s12
      %p202 = scmp.lt.s32.totalorder %s12, 3
      %p203 = pnand %p201, %p202
      %p204 = pneg %p203
      // Predicated region
      $region29: #{tpu_custom_call.1} parent=5 // pred_check
        _
      $region30: #{tpu_custom_call.1} parent=5 // pred_check_branch
        %206 = sbr.rel (%p203) target = $region32
      $region31: #{tpu_custom_call.1} parent=5 // pred_region
        %s207 = ssub.s32 %s12, 1
        %s208 = smul.u32 2, %s22
        %p209 = scmp.lt.s32.totalorder %s208, 3
        %s210 = scalar_select %p209, %s208, 3
        %p211 = scmp.lt.s32.totalorder %s23, 0
        %s212 = scalar_select %p211, %s23, 0
        %s213 = sadd.s32 %s212, %s210
        %s214 = smul.addr %s213, 8
        %s215 = scalar_lea.vmem %s0, %s214
        %p216 = pneg %p59
        %p217 = pneg %p56
        %s218 = smul.u32 2, %s22
        %s219 = smul.u32 2, %s24
        %p220 = scmp.lt.s32.totalorder %s218, 3
        %s221 = scalar_select %p220, %s218, 3
        %p222 = scmp.lt.s32.totalorder %s219, 1
        %s223 = scalar_select %p222, %s219, 1
        %s224 = smul.addr %s221, 2
        %s225 = sadd.s32 %s223, %s224
        %s226 = smul.addr %s225, 8
        %s227 = scalar_lea.vmem %s1, %s226
        %p228 = pneg %p87
        %p229 = pneg %p84
        %s230 = smul.u32 2, %s22
        %p231 = scmp.lt.s32.totalorder %s230, 3
        %s232 = scalar_select %p231, %s230, 3
        %p233 = scmp.lt.s32.totalorder %s24, 0
        %s234 = scalar_select %p233, %s24, 0
        %s235 = sadd.s32 %s234, %s232
        %s236 = smul.addr %s235, 8
        %s237 = scalar_lea.vmem %s2, %s236
        %p238 = pneg %p115
        %p239 = pneg %p112
        %p240 = pneg %p143
        %p241 = pneg %p140
        %s242 = sand.u32 %s130, 1
        %s243 = scalar_lea.sflag [#allocation6], %s242
        %s244 = sand.u32 %s130, 1
        %s245 = smul.addr %s244, 16
        %s246 = scalar_lea.vmem [#allocation5], %s245
        %s247 = smul.u32 2, %s22
        %p248 = scmp.lt.s32.totalorder %s247, 3
        %s249 = scalar_select %p248, %s247, 3
        %p250 = scmp.lt.s32.totalorder %s23, 0
        %s251 = scalar_select %p250, %s23, 0
        %s252 = sadd.s32 %s251, %s249
        %s253 = smul.addr %s252, 8
        %s254 = scalar_lea.vmem %s0, %s253
        %s255 = smul.u32 2, %s22
        %s256 = smul.u32 2, %s22
        %s257 = smul.u32 2, %s24
        %p258 = scmp.lt.s32.totalorder %s256, 3
        %s259 = scalar_select %p258, %s256, 3
        %p260 = scmp.lt.s32.totalorder %s257, 1
        %s261 = scalar_select %p260, %s257, 1
        %s262 = smul.addr %s259, 2
        %s263 = sadd.s32 %s261, %s262
        %s264 = smul.addr %s263, 8
        %s265 = scalar_lea.vmem %s1, %s264
        %s266 = smul.u32 2, %s22
        %s267 = smul.u32 2, %s24
        %s268 = smul.u32 2, %s22
        %p269 = scmp.lt.s32.totalorder %s268, 3
        %s270 = scalar_select %p269, %s268, 3
        %p271 = scmp.lt.s32.totalorder %s24, 0
        %s272 = scalar_select %p271, %s24, 0
        %s273 = sadd.s32 %s272, %s270
        %s274 = smul.addr %s273, 8
        %s275 = scalar_lea.vmem %s2, %s274
        %s276 = smul.u32 2, %s22
        %s277 = smul.u32 2, %s22
        %p278 = scmp.eq.s32.totalorder %s24, 0
        // Predicated region
        $region33: #{tpu_custom_call.1} parent=31 // pred_check
          %p279 = pneg %p278
        $region34: #{tpu_custom_call.1} parent=31 // pred_check_branch
          %281 = sbr.rel (%p279) target = $region36
        $region35: #{tpu_custom_call.1} parent=31 // pred_region
          %vm282 = vcmask 122880
          %283 = vst.msk [vmem:[#allocation2] sm:$0x1] %vm282, -inf
          %284 = vst.msk [vmem:[#allocation2 + $0x1] sm:$0x1] %vm282, -inf
          %285 = vst.msk [vmem:[#allocation3] sm:$0x1] %vm282, 0.0
          %286 = vst.msk [vmem:[#allocation3 + $0x1] sm:$0x1] %vm282, 0.0
          %vm287 = vcmask 130048
          %288 = vst.msk [vmem:[#allocation4] sm:$0xff] %vm287, 0.0
          %289 = vst.msk [vmem:[#allocation4 + $0x8] sm:$0xff] %vm287, 0.0
        $region36: #{tpu_custom_call.1} parent=31 // pred_fallthru
          _
        %v290 = vld [vmem:[%s254] sm:$0xff]
        %v291 = vld [vmem:[%s254 + $0x8] sm:$0xff]
        %v292 = vmul.f32 %v290, 0.35355338
        %v293 = vmul.f32 %v291, 0.35355338
        %v294 = vld [vmem:[%s265] sm:$0xff]
        %v295 = vld [vmem:[%s265 + $0x8] sm:$0xff]
        %v296 = vld [vmem:[%s265 + $0x10] sm:$0xff]
        %v297 = vld [vmem:[%s265 + $0x18] sm:$0xff]
        %v298 = vld [vmem:[%s275] sm:$0xff]
        %v299 = vld [vmem:[%s275 + $0x8] sm:$0xff]
        %vm300 = vcmask 64512
        %v302 = vsel %vm300, %v294, 0
        %v305 = vsel %vm300, %v295, 0
        %307 = vmatprep.subr.mxu0 0.0
        %308 = vmatpush1.msra.mxu0 %v292
        %309 = vmatprep.subr.mxu0 0.0
        %310 = vmatpush1.msra.mxu0 0.0
        %311 = vmatprep.subr.mxu0 0.0
        %312 = vmatpush1.msra.mxu0 0.0
        %313 = vmatprep.subr.mxu0 0.0
        %314 = vmatpush1.msra.mxu0 0.0
        %315 = vmatprep.subr.mxu0 0.0
        %316 = vmatpush1.msra.mxu0 0.0
        %317 = vmatprep.subr.mxu0 0.0
        %318 = vmatpush1.msra.mxu0 0.0
        %319 = vmatprep.subr.mxu0 0.0
        %320 = vmatpush1.msra.mxu0 0.0
        %321 = vmatprep.subr.mxu0 0.0
        %322 = vmatpush1.msra.mxu0 0.0
        %323 = vmatprep.subr.mxu0 0.0
        %324 = vmatpush1.msra.mxu0 0.0
        %325 = vmatprep.subr.mxu0 0.0
        %326 = vmatpush1.msra.mxu0 0.0
        %327 = vmatprep.subr.mxu0 0.0
        %328 = vmatpush1.msra.mxu0 0.0
        %329 = vmatprep.subr.mxu0 0.0
        %330 = vmatpush1.msra.mxu0 0.0
        %331 = vmatprep.subr.mxu0 0.0
        %332 = vmatpush1.msra.mxu0 0.0
        %333 = vmatprep.subr.mxu0 0.0
        %334 = vmatpush1.msra.mxu0 0.0
        %335 = vmatprep.subr.mxu0 0.0
        %336 = vmatpush1.msra.mxu0 0.0
        %337 = vmatprep.subr.mxu0 0.0
        %338 = vmatpush1.msra.mxu0 0.0
        %339 = vmatprep.subr.mxu0 0.0
        %340 = vmatpush1.msra.mxu0 0.0
        %341 = vmatprep.subr.mxu0 0.0
        %342 = vmatpush1.msra.mxu0 0.0
        %343 = vmatprep.subr.mxu0 0.0
        %344 = vmatpush1.msra.mxu0 0.0
        %345 = vmatprep.subr.mxu0 0.0
        %346 = vmatpush1.msra.mxu0 0.0
        %347 = vmatprep.subr.mxu0 0.0
        %348 = vmatpush1.msra.mxu0 0.0
        %349 = vmatprep.subr.mxu0 0.0
        %350 = vmatpush1.msra.mxu0 0.0
        %351 = vmatprep.subr.mxu0 0.0
        %352 = vmatpush1.msra.mxu0 0.0
        %353 = vmatprep.subr.mxu0 0.0
        %354 = vmatpush1.msra.mxu0 0.0
        %355 = vmatprep.subr.mxu0 0.0
        %356 = vmatpush1.msra.mxu0 0.0
        %357 = vmatprep.subr.mxu0 0.0
        %358 = vmatpush1.msra.mxu0 0.0
        %359 = vmatprep.subr.mxu0 0.0
        %360 = vmatpush1.msra.mxu0 0.0
        %361 = vmatprep.subr.mxu0 0.0
        %362 = vmatpush1.msra.mxu0 0.0
        %363 = vmatprep.subr.mxu0 0.0
        %364 = vmatpush1.msra.mxu0 0.0
        %365 = vmatprep.subr.mxu0 0.0
        %366 = vmatpush1.msra.mxu0 0.0
        %367 = vmatprep.subr.mxu0 0.0
        %368 = vmatpush1.msra.mxu0 0.0
        %369 = vmatprep.subr.mxu0 0.0
        %370 = vmatpush1.msra.mxu0 0.0
        %371 = vmatprep.mubr.f32.mxu0 0.0
        %372 = vmatmul.mubr.f32.gmra.mrb[0].mxu0 %v302
        %v373 = vpop.f32.mrb[0].mxu0
        %v374 = vadd.f32 0.0, %v373
        %v375 = vpop.f32.mrb[0].mxu0
        %376 = vmatprep.mubr.f32.mxu0 0.0
        %377 = vmatmul.mubr.f32.gmra.mrb[0].mxu0 %v305
        %v378 = vpop.f32.mrb[0].mxu0
        %v379 = vadd.f32 0.0, %v378
        %v380 = vpop.f32.mrb[0].mxu0
        %381 = vdwg.mxu0
        %v383 = vsel %vm300, %v296, 0
        %v386 = vsel %vm300, %v297, 0
        %388 = vmatprep.subr.mxu0 0.0
        %389 = vmatpush1.msra.mxu0 %v293
        %390 = vmatprep.subr.mxu0 0.0
        %391 = vmatpush1.msra.mxu0 0.0
        %392 = vmatprep.subr.mxu0 0.0
        %393 = vmatpush1.msra.mxu0 0.0
        %394 = vmatprep.subr.mxu0 0.0
        %395 = vmatpush1.msra.mxu0 0.0
        %396 = vmatprep.subr.mxu0 0.0
        %397 = vmatpush1.msra.mxu0 0.0
        %398 = vmatprep.subr.mxu0 0.0
        %399 = vmatpush1.msra.mxu0 0.0
        %400 = vmatprep.subr.mxu0 0.0
        %401 = vmatpush1.msra.mxu0 0.0
        %402 = vmatprep.subr.mxu0 0.0
        %403 = vmatpush1.msra.mxu0 0.0
        %404 = vmatprep.subr.mxu0 0.0
        %405 = vmatpush1.msra.mxu0 0.0
        %406 = vmatprep.subr.mxu0 0.0
        %407 = vmatpush1.msra.mxu0 0.0
        %408 = vmatprep.subr.mxu0 0.0
        %409 = vmatpush1.msra.mxu0 0.0
        %410 = vmatprep.subr.mxu0 0.0
        %411 = vmatpush1.msra.mxu0 0.0
        %412 = vmatprep.subr.mxu0 0.0
        %413 = vmatpush1.msra.mxu0 0.0
        %414 = vmatprep.subr.mxu0 0.0
        %415 = vmatpush1.msra.mxu0 0.0
        %416 = vmatprep.subr.mxu0 0.0
        %417 = vmatpush1.msra.mxu0 0.0
        %418 = vmatprep.subr.mxu0 0.0
        %419 = vmatpush1.msra.mxu0 0.0
        %420 = vmatprep.subr.mxu0 0.0
        %421 = vmatpush1.msra.mxu0 0.0
        %422 = vmatprep.subr.mxu0 0.0
        %423 = vmatpush1.msra.mxu0 0.0
        %424 = vmatprep.subr.mxu0 0.0
        %425 = vmatpush1.msra.mxu0 0.0
        %426 = vmatprep.subr.mxu0 0.0
        %427 = vmatpush1.msra.mxu0 0.0
        %428 = vmatprep.subr.mxu0 0.0
        %429 = vmatpush1.msra.mxu0 0.0
        %430 = vmatprep.subr.mxu0 0.0
        %431 = vmatpush1.msra.mxu0 0.0
        %432 = vmatprep.subr.mxu0 0.0
        %433 = vmatpush1.msra.mxu0 0.0
        %434 = vmatprep.subr.mxu0 0.0
        %435 = vmatpush1.msra.mxu0 0.0
        %436 = vmatprep.subr.mxu0 0.0
        %437 = vmatpush1.msra.mxu0 0.0
        %438 = vmatprep.subr.mxu0 0.0
        %439 = vmatpush1.msra.mxu0 0.0
        %440 = vmatprep.subr.mxu0 0.0
        %441 = vmatpush1.msra.mxu0 0.0
        %442 = vmatprep.subr.mxu0 0.0
        %443 = vmatpush1.msra.mxu0 0.0
        %444 = vmatprep.subr.mxu0 0.0
        %445 = vmatpush1.msra.mxu0 0.0
        %446 = vmatprep.subr.mxu0 0.0
        %447 = vmatpush1.msra.mxu0 0.0
        %448 = vmatprep.subr.mxu0 0.0
        %449 = vmatpush1.msra.mxu0 0.0
        %450 = vmatprep.subr.mxu0 0.0
        %451 = vmatpush1.msra.mxu0 0.0
        %452 = vmatprep.mubr.f32.mxu0 0.0
        %453 = vmatmul.mubr.f32.gmra.mrb[0].mxu0 %v383
        %v454 = vpop.f32.mrb[0].mxu0
        %v455 = vadd.f32 0.0, %v454
        %v456 = vpop.f32.mrb[0].mxu0
        %457 = vmatprep.mubr.f32.mxu0 0.0
        %458 = vmatmul.mubr.f32.gmra.mrb[0].mxu0 %v386
        %v459 = vpop.f32.mrb[0].mxu0
        %v460 = vadd.f32 0.0, %v459
        %v461 = vpop.f32.mrb[0].mxu0
        %462 = vdwg.mxu0
        %v463 = vld [vmem:[#allocation2] sm:$0x1]
        %v464 = vld [vmem:[#allocation2 + $0x1] sm:$0x1]
        %vm465 = vcmask 130048
        %v466 = vsel %vm465, %v374, -inf
        %v467 = vsel %vm465, %v379, -inf
        %v468 = vmax.f32 %v466, %v467
        %v469 = vrot.slane %v468, 4
        %v470 = vmax.f32 %v468, %v469
        %v471 = vrot.slane %v470, 2
        %v472 = vmax.f32 %v470, %v471
        %v473 = vrot.slane %v472, 1
        %v474 = vmax.f32 %v472, %v473
        %v475 = vsel %vm465, %v455, -inf
        %v476 = vsel %vm465, %v460, -inf
        %v477 = vmax.f32 %v475, %v476
        %v478 = vrot.slane %v477, 4
        %v479 = vmax.f32 %v477, %v478
        %v480 = vrot.slane %v479, 2
        %v481 = vmax.f32 %v479, %v480
        %v482 = vrot.slane %v481, 1
        %v483 = vmax.f32 %v481, %v482
        %v484 = vmax.f32 %v463, %v474
        %v485 = vmax.f32 %v464, %v483
        %v486 = vsub.f32 %v463, %v484
        %v487 = vsub.f32 %v464, %v485
        %v488 = vmul.f32 %v486, 1.442695
        %v489 = vpow.pop %v488
        %v490 = vmul.f32 %v487, 1.442695
        %v491 = vpow.pop %v490
        %v494 = vlaneseq
        %v495 = vshrl.u32 %v494, 7
        %v496 = vsub.s32 0, %v495
        %v497 = vrot.slane %v484, %v496
        %v498 = vlaneseq
        %v499 = vshrl.u32 %v498, 7
        %v500 = vsub.s32 0, %v499
        %v501 = vrot.slane %v485, %v500
        %v504 = vsub.f32 %v374, %v497
        %v505 = vsub.f32 %v379, %v497
        %v506 = vsub.f32 %v455, %v501
        %v507 = vsub.f32 %v460, %v501
        %v508 = vmul.f32 %v504, 1.442695
        %v509 = vpow.pop %v508
        %v510 = vmul.f32 %v505, 1.442695
        %v511 = vpow.pop %v510
        %v512 = vmul.f32 %v506, 1.442695
        %v513 = vpow.pop %v512
        %v514 = vmul.f32 %v507, 1.442695
        %v515 = vpow.pop %v514
        %v516 = vld [vmem:[#allocation3] sm:$0x1]
        %v517 = vld [vmem:[#allocation3 + $0x1] sm:$0x1]
        %v518 = vmul.f32 %v489, %v516
        %v519 = vmul.f32 %v491, %v517
        %v520 = vsel %vm465, %v509, 0.0
        %v521 = vsel %vm465, %v511, 0.0
        %v522 = vadd.f32 %v520, %v521
        %v523 = vrot.slane %v522, 4
        %v524 = vadd.f32 %v522, %v523
        %v525 = vrot.slane %v524, 2
        %v526 = vadd.f32 %v524, %v525
        %v527 = vrot.slane %v526, 1
        %v528 = vadd.f32 %v526, %v527
        %v529 = vsel %vm465, %v513, 0.0
        %v530 = vsel %vm465, %v515, 0.0
        %v531 = vadd.f32 %v529, %v530
        %v532 = vrot.slane %v531, 4
        %v533 = vadd.f32 %v531, %v532
        %v534 = vrot.slane %v533, 2
        %v535 = vadd.f32 %v533, %v534
        %v536 = vrot.slane %v535, 1
        %v537 = vadd.f32 %v535, %v536
        %v538 = vadd.f32 %v518, %v528
        %v539 = vadd.f32 %v519, %v537
        %vm540 = vcmask 122880
        %541 = vst.msk [vmem:[#allocation3] sm:$0x1] %vm540, %v538
        %542 = vst.msk [vmem:[#allocation3 + $0x1] sm:$0x1] %vm540, %v539
        %v544 = vsel %vm465, %v298, 0
        %546 = vmatprep.subr.mxu0 0.0
        %547 = vmatpush1.msra.mxu0 %v509
        %548 = vmatprep.subr.mxu0 0.0
        %549 = vmatpush1.msra.mxu0 %v511
        %550 = vmatprep.subr.mxu0 0.0
        %551 = vmatpush1.msra.mxu0 0.0
        %552 = vmatprep.subr.mxu0 0.0
        %553 = vmatpush1.msra.mxu0 0.0
        %554 = vmatprep.subr.mxu0 0.0
        %555 = vmatpush1.msra.mxu0 0.0
        %556 = vmatprep.subr.mxu0 0.0
        %557 = vmatpush1.msra.mxu0 0.0
        %558 = vmatprep.subr.mxu0 0.0
        %559 = vmatpush1.msra.mxu0 0.0
        %560 = vmatprep.subr.mxu0 0.0
        %561 = vmatpush1.msra.mxu0 0.0
        %562 = vmatprep.subr.mxu0 0.0
        %563 = vmatpush1.msra.mxu0 0.0
        %564 = vmatprep.subr.mxu0 0.0
        %565 = vmatpush1.msra.mxu0 0.0
        %566 = vmatprep.subr.mxu0 0.0
        %567 = vmatpush1.msra.mxu0 0.0
        %568 = vmatprep.subr.mxu0 0.0
        %569 = vmatpush1.msra.mxu0 0.0
        %570 = vmatprep.subr.mxu0 0.0
        %571 = vmatpush1.msra.mxu0 0.0
        %572 = vmatprep.subr.mxu0 0.0
        %573 = vmatpush1.msra.mxu0 0.0
        %574 = vmatprep.subr.mxu0 0.0
        %575 = vmatpush1.msra.mxu0 0.0
        %576 = vmatprep.subr.mxu0 0.0
        %577 = vmatpush1.msra.mxu0 0.0
        %578 = vmatprep.subr.mxu0 0.0
        %579 = vmatpush1.msra.mxu0 0.0
        %580 = vmatprep.subr.mxu0 0.0
        %581 = vmatpush1.msra.mxu0 0.0
        %582 = vmatprep.subr.mxu0 0.0
        %583 = vmatpush1.msra.mxu0 0.0
        %584 = vmatprep.subr.mxu0 0.0
        %585 = vmatpush1.msra.mxu0 0.0
        %586 = vmatprep.subr.mxu0 0.0
        %587 = vmatpush1.msra.mxu0 0.0
        %588 = vmatprep.subr.mxu0 0.0
        %589 = vmatpush1.msra.mxu0 0.0
        %590 = vmatprep.subr.mxu0 0.0
        %591 = vmatpush1.msra.mxu0 0.0
        %592 = vmatprep.subr.mxu0 0.0
        %593 = vmatpush1.msra.mxu0 0.0
        %594 = vmatprep.subr.mxu0 0.0
        %595 = vmatpush1.msra.mxu0 0.0
        %596 = vmatprep.subr.mxu0 0.0
        %597 = vmatpush1.msra.mxu0 0.0
        %598 = vmatprep.subr.mxu0 0.0
        %599 = vmatpush1.msra.mxu0 0.0
        %600 = vmatprep.subr.mxu0 0.0
        %601 = vmatpush1.msra.mxu0 0.0
        %602 = vmatprep.subr.mxu0 0.0
        %603 = vmatpush1.msra.mxu0 0.0
        %604 = vmatprep.subr.mxu0 0.0
        %605 = vmatpush1.msra.mxu0 0.0
        %606 = vmatprep.subr.mxu0 0.0
        %607 = vmatpush1.msra.mxu0 0.0
        %608 = vmatprep.subr.mxu0 0.0
        %609 = vmatpush1.msra.mxu0 0.0
        %610 = vmatprep.mubr.f32.mxu0 0.0
        %611 = vmatmul.mubr.f32.gmra.mrb[0].mxu0 %v544
        %v612 = vpop.f32.mrb[0].mxu0
        %v613 = vadd.f32 0.0, %v612
        %v614 = vpop.f32.mrb[0].mxu0
        %615 = vdwg.mxu0
        %v617 = vsel %vm465, %v299, 0
        %619 = vmatprep.subr.mxu0 0.0
        %620 = vmatpush1.msra.mxu0 %v513
        %621 = vmatprep.subr.mxu0 0.0
        %622 = vmatpush1.msra.mxu0 %v515
        %623 = vmatprep.subr.mxu0 0.0
        %624 = vmatpush1.msra.mxu0 0.0
        %625 = vmatprep.subr.mxu0 0.0
        %626 = vmatpush1.msra.mxu0 0.0
        %627 = vmatprep.subr.mxu0 0.0
        %628 = vmatpush1.msra.mxu0 0.0
        %629 = vmatprep.subr.mxu0 0.0
        %630 = vmatpush1.msra.mxu0 0.0
        %631 = vmatprep.subr.mxu0 0.0
        %632 = vmatpush1.msra.mxu0 0.0
        %633 = vmatprep.subr.mxu0 0.0
        %634 = vmatpush1.msra.mxu0 0.0
        %635 = vmatprep.subr.mxu0 0.0
        %636 = vmatpush1.msra.mxu0 0.0
        %637 = vmatprep.subr.mxu0 0.0
        %638 = vmatpush1.msra.mxu0 0.0
        %639 = vmatprep.subr.mxu0 0.0
        %640 = vmatpush1.msra.mxu0 0.0
        %641 = vmatprep.subr.mxu0 0.0
        %642 = vmatpush1.msra.mxu0 0.0
        %643 = vmatprep.subr.mxu0 0.0
        %644 = vmatpush1.msra.mxu0 0.0
        %645 = vmatprep.subr.mxu0 0.0
        %646 = vmatpush1.msra.mxu0 0.0
        %647 = vmatprep.subr.mxu0 0.0
        %648 = vmatpush1.msra.mxu0 0.0
        %649 = vmatprep.subr.mxu0 0.0
        %650 = vmatpush1.msra.mxu0 0.0
        %651 = vmatprep.subr.mxu0 0.0
        %652 = vmatpush1.msra.mxu0 0.0
        %653 = vmatprep.subr.mxu0 0.0
        %654 = vmatpush1.msra.mxu0 0.0
        %655 = vmatprep.subr.mxu0 0.0
        %656 = vmatpush1.msra.mxu0 0.0
        %657 = vmatprep.subr.mxu0 0.0
        %658 = vmatpush1.msra.mxu0 0.0
        %659 = vmatprep.subr.mxu0 0.0
        %660 = vmatpush1.msra.mxu0 0.0
        %661 = vmatprep.subr.mxu0 0.0
        %662 = vmatpush1.msra.mxu0 0.0
        %663 = vmatprep.subr.mxu0 0.0
        %664 = vmatpush1.msra.mxu0 0.0
        %665 = vmatprep.subr.mxu0 0.0
        %666 = vmatpush1.msra.mxu0 0.0
        %667 = vmatprep.subr.mxu0 0.0
        %668 = vmatpush1.msra.mxu0 0.0
        %669 = vmatprep.subr.mxu0 0.0
        %670 = vmatpush1.msra.mxu0 0.0
        %671 = vmatprep.subr.mxu0 0.0
        %672 = vmatpush1.msra.mxu0 0.0
        %673 = vmatprep.subr.mxu0 0.0
        %674 = vmatpush1.msra.mxu0 0.0
        %675 = vmatprep.subr.mxu0 0.0
        %676 = vmatpush1.msra.mxu0 0.0
        %677 = vmatprep.subr.mxu0 0.0
        %678 = vmatpush1.msra.mxu0 0.0
        %679 = vmatprep.subr.mxu0 0.0
        %680 = vmatpush1.msra.mxu0 0.0
        %681 = vmatprep.subr.mxu0 0.0
        %682 = vmatpush1.msra.mxu0 0.0
        %683 = vmatprep.mubr.f32.mxu0 0.0
        %684 = vmatmul.mubr.f32.gmra.mrb[0].mxu0 %v617
        %v685 = vpop.f32.mrb[0].mxu0
        %v686 = vadd.f32 0.0, %v685
        %v687 = vpop.f32.mrb[0].mxu0
        %688 = vdwg.mxu0
        %v689 = vld [vmem:[#allocation4] sm:$0xff]
        %v690 = vld [vmem:[#allocation4 + $0x8] sm:$0xff]
        %v693 = vlaneseq
        %v694 = vshrl.u32 %v693, 7
        %v695 = vsub.s32 0, %v694
        %v696 = vrot.slane %v489, %v695
        %v697 = vlaneseq
        %v698 = vshrl.u32 %v697, 7
        %v699 = vsub.s32 0, %v698
        %v700 = vrot.slane %v491, %v699
        %v703 = vmul.f32 %v696, %v689
        %v704 = vmul.f32 %v700, %v690
        %v705 = vadd.f32 %v703, %v613
        %v706 = vadd.f32 %v704, %v686
        %707 = vst.msk [vmem:[#allocation4] sm:$0xff] %vm465, %v705
        %708 = vst.msk [vmem:[#allocation4 + $0x8] sm:$0xff] %vm465, %v706
        %709 = vst.msk [vmem:[#allocation2] sm:$0x1] %vm540, %v484
        %710 = vst.msk [vmem:[#allocation2 + $0x1] sm:$0x1] %vm540, %v485
        // Predicated region
        $region37: #{tpu_custom_call.1} parent=31 // pred_check
          %p711 = pneg %p278
        $region38: #{tpu_custom_call.1} parent=31 // pred_check_branch
          %713 = sbr.rel (%p711) target = $region40
        $region39: #{tpu_custom_call.1} parent=31 // pred_region
          %v714 = vld [vmem:[#allocation3] sm:$0x1]
          %v715 = vld [vmem:[#allocation3 + $0x1] sm:$0x1]
          %v716 = vrcp.pop %v714
          %v717 = vrcp.pop %v715
          %v718 = vld [vmem:[#allocation4] sm:$0xff]
          %v719 = vld [vmem:[#allocation4 + $0x8] sm:$0xff]
          %v722 = vlaneseq
          %v723 = vshrl.u32 %v722, 7
          %v724 = vsub.s32 0, %v723
          %v725 = vrot.slane %v716, %v724
          %v726 = vlaneseq
          %v727 = vshrl.u32 %v726, 7
          %v728 = vsub.s32 0, %v727
          %v729 = vrot.slane %v717, %v728
          %v732 = vmul.f32 %v718, %v725
          %v733 = vmul.f32 %v719, %v729
          %734 = vst.msk [vmem:[%s246] sm:$0xff] %vm465, %v732
          %735 = vst.msk [vmem:[%s246 + $0x8] sm:$0xff] %vm465, %v733
        $region40: #{tpu_custom_call.1} parent=31 // pred_fallthru
          _
        %s736 = sand.u32 %s130, 1
        %s737 = scalar_lea.sflag [#allocation6], %s736
        %s738 = sand.u32 %s130, 1
        %s739 = smul.addr %s738, 16
        %s740 = scalar_lea.vmem [#allocation5], %s739
        // Predicated region
        $region41: #{tpu_custom_call.1} parent=31 // pred_check
          %p741 = pneg %p140
        $region42: #{tpu_custom_call.1} parent=31 // pred_check_branch
          %743 = sbr.rel (%p741) target = $region44
        $region43: #{tpu_custom_call.1} parent=31 // pred_region
          %s744 = smul.u32 2, %s22
          %s746 = ssub.s32 256, 256
          %747 = vsyncadd %s737, %s746
          %s748 = sadd.s32 %s23, %s744
          %s749 = smul.addr %s748, 128
          %s750 = scalar_lea.hbm %s3, %s749
          %s751 = sshll.u32 %s740, 4
          %s752 = int_to_ptr.vmem [resolvable:$true] %s751
          %757 = dma.vmem_to_hbm [thread:$0]  %s752, 256, %s750, %s737, 128, 128, 8
        $region44: #{tpu_custom_call.1} parent=31 // pred_fallthru
          _
      $region32: #{tpu_custom_call.1} parent=5 // pred_fallthru
        _
      %p758 = scmp.le.s32.totalorder 2, %s12
      // Predicated region
      $region45: #{tpu_custom_call.1} parent=5 // pred_check
        %p759 = pneg %p758
      $region46: #{tpu_custom_call.1} parent=5 // pred_check_branch
        %761 = sbr.rel (%p759) target = $region48
      $region47: #{tpu_custom_call.1} parent=5 // pred_region
        %s762 = ssub.s32 %s12, 2
        // Predicated region
        $region49: #{tpu_custom_call.1} parent=47 // pred_check
          %p763 = pneg %p146
        $region50: #{tpu_custom_call.1} parent=47 // pred_check_branch
          %765 = sbr.rel (%p763) target = $region52
        $region51: #{tpu_custom_call.1} parent=47 // pred_region
          %s766 = sand.u32 %s131, 1
          %s767 = scalar_lea.sflag [#allocation6], %s766
          %s768 = sand.u32 %s131, 1
          %s769 = smul.addr %s768, 16
          %s770 = scalar_lea.vmem [#allocation5], %s769
          %771 = dma.done %s767, 256
        $region52: #{tpu_custom_call.1} parent=47 // pred_fallthru
          _
      $region48: #{tpu_custom_call.1} parent=5 // pred_fallthru
        _
    $region6: #{tpu_custom_call.1} parent=1 // loop_footer
      %s16 = sadd.s32 1, %s12
    $region7: #{tpu_custom_call.1} parent=1 // loop_footer_branch
      %11 = sbr.rel target = $region3
    $region8: #{tpu_custom_call.1} parent=1 // loop_exit
      _
    %772 = vsyncpa [#allocation6], 1
    %s773 = scalar_lea.sflag [#allocation6], 1
    %774 = vsyncpa %s773, 1

</llo_original>
